<compile_context>
chip_gen: v6e
topology: v6e:2x2x1
jax: 0.10.0
libtpu: 0.0.40
codegen_flags: <defaults>
</compile_context>

<pallas_src>
import jax
import jax.numpy as jnp
from jax.experimental import pallas as pl
from jax.experimental.pallas import tpu as pltpu


def _cutmix_box_and_lambda(key, H, W, p, alpha):
    """Scalar glue: apply-with-prob-p flag, Beta(alpha,alpha) lambda, random box."""
    k_p, k_lam, k_x, k_y = jax.random.split(key, 4)

    apply = jax.random.uniform(k_p) < p
    lam0 = jax.random.beta(k_lam, alpha, alpha)    # Beta == Dirichlet([a, a])[0]
    r_x = jax.random.randint(k_x, (), 0, W)
    r_y = jax.random.randint(k_y, (), 0, H)

    r = 0.5 * jnp.sqrt(1.0 - lam0)
    r_w_half = (r * W).astype(jnp.int32)           # trunc == int() for r >= 0
    r_h_half = (r * H).astype(jnp.int32)
    x1 = jnp.maximum(r_x - r_w_half, 0)
    y1 = jnp.maximum(r_y - r_h_half, 0)
    x2 = jnp.minimum(r_x + r_w_half, W)
    y2 = jnp.minimum(r_y + r_h_half, H)
    lam = 1.0 - ((x2 - x1) * (y2 - y1)).astype(jnp.float32) / float(W * H)

    # Fold the "rand >= p -> return unchanged" branch into an empty box, lam=1.
    zero = jnp.int32(0)
    y1 = jnp.where(apply, y1, zero)
    y2 = jnp.where(apply, y2, zero)
    x1 = jnp.where(apply, x1, zero)
    x2 = jnp.where(apply, x2, zero)
    lam = jnp.where(apply, lam, jnp.float32(1.0))

    box = jnp.stack([y1, y2, x1, x2]).astype(jnp.int32)   # (4,) -> SMEM
    return box, lam


def _make_cutmix_image_kernel(TB, B, W, HW):
    """Builds the image kernel for a static batch-tile size TB."""

    def kernel(box_ref, x_ref, batch_hbm, o_ref, carry_ref, sem):
        # box_ref:   SMEM int32 [y1, y2, x1, x2]
        # x_ref:     VMEM (TB, C, HW)   current block of the batch
        # batch_hbm: ANY  (B, C, HW)    whole batch (only used for the wrap row)
        # o_ref:     VMEM (TB, C, HW)
        # carry_ref: VMEM (C, HW)       batch row preceding this block's first row
        g = pl.program_id(0)
        C = x_ref.shape[1]

        # One-time preload of the wrap-around row batch[B-1] into the carry.
        @pl.when(g == 0)
        def _():
            cp = pltpu.make_async_copy(batch_hbm.at[B - 1], carry_ref, sem)
            cp.start()
            cp.wait()

        y1 = box_ref[0]
        y2 = box_ref[1]
        x1 = box_ref[2]
        x2 = box_ref[3]

        # Flat-index box mask (one small iota): row in [y1,y2) <=> idx in [y1*W, y2*W).
        idx = jax.lax.broadcasted_iota(jnp.int32, (1, 1, HW), 2)
        col = idx % W
        inside_i = ((idx >= y1 * W) & (idx < y2 * W)
                    & (col >= x1) & (col < x2)).astype(jnp.int32)   # (1,1,HW)

        # Row 0 of this block mixes with the carried previous batch row.
        cut0 = jnp.broadcast_to(inside_i[0], (C, HW)) != 0
        o_ref[0] = jnp.where(cut0, carry_ref[...], x_ref[0])

        # Rows 1..TB-1 mix with the previous row inside the same block.
        if TB > 1:
            cut = jnp.broadcast_to(inside_i, (TB - 1, C, HW)) != 0
            o_ref[pl.ds(1, TB - 1)] = jnp.where(
                cut, x_ref[pl.ds(0, TB - 1)], x_ref[pl.ds(1, TB - 1)])

        # Carry the last row of this block for the next grid step.
        carry_ref[...] = x_ref[TB - 1]

    return kernel


def _pick_batch_tile(B, row_bytes, cap_bytes=2 * 1024 * 1024):
    """Largest divisor of B whose block stays within ~cap_bytes, keeping
    2 pipeline buffers x (input + output) well under every chip's scoped VMEM
    (v5e 16 MiB default, v7x 32/64 MiB)."""
    tb = 1
    for d in range(1, B + 1):
        if B % d == 0 and d * row_bytes <= cap_bytes:
            tb = d
    return tb


def random_cutmix(batch, target, key, num_classes, p=0.5, alpha=1.0):
    """JAX/Pallas equivalent of RandomCutMix.forward.

    batch:  float (B, C, H, W)
    target: int32 (B,)   (int64 in torch; int32 has identical semantics here)
    Returns (mixed_batch, mixed_one_hot_target).
    """
    B, C, H, W = batch.shape
    HW = H * W
    box, lam = _cutmix_box_and_lambda(key, H, W, p, alpha)

    itemsize = jnp.dtype(batch.dtype).itemsize
    TB = _pick_batch_tile(B, C * HW * itemsize)
    nb = B // TB

    # Lane-dense layout: flatten spatial dims so the last dim is H*W (free reshape).
    flat = batch.reshape(B, C, HW)

    mixed_flat = pl.pallas_call(
        _make_cutmix_image_kernel(TB, B, W, HW),
        out_shape=jax.ShapeDtypeStruct((B, C, HW), batch.dtype),
        grid=(nb,),
        in_specs=[
            pl.BlockSpec(memory_space=pltpu.MemorySpace.SMEM),      # box coords
            pl.BlockSpec((TB, C, HW), lambda g: (g, 0, 0)),         # batch blocks
            pl.BlockSpec(memory_space=pl.ANY),                      # batch in HBM
        ],
        out_specs=pl.BlockSpec((TB, C, HW), lambda g: (g, 0, 0)),
        scratch_shapes=[
            pltpu.VMEM((C, HW), batch.dtype),    # carried previous batch row
            pltpu.SemaphoreType.DMA,             # semaphore for the one preload DMA
        ],
        compiler_params=pltpu.CompilerParams(
            # Serial: the carry scratch makes grid steps order-dependent.
            dimension_semantics=("arbitrary",)),
        cost_estimate=pl.CostEstimate(
            flops=B * C * HW,
            transcendentals=0,
            bytes_accessed=(2 * B + 1) * C * HW * itemsize),
    )(box, flat, flat)

    mixed_batch = mixed_flat.reshape(B, C, H, W)

    # Target path: tiny VPU work -> plain jnp (per perf review); matches
    # target*lam + roll(target, 1)*(1 - lam) on one-hot targets.
    onehot = jax.nn.one_hot(target, num_classes, dtype=batch.dtype)
    mixed_target = lam * onehot + (1.0 - lam) * jnp.roll(onehot, 1, axis=0)
    return mixed_batch, mixed_target


def random_cutmix_reference(batch, target, key, num_classes, p=0.5, alpha=1.0):
    """Pure-jnp reference (same RNG / same box) used only for verification."""
    B, C, H, W = batch.shape
    box, lam = _cutmix_box_and_lambda(key, H, W, p, alpha)
    y1, y2, x1, x2 = box[0], box[1], box[2], box[3]
    rows = jnp.arange(H)[:, None]
    cols = jnp.arange(W)[None, :]
    inside = (rows >= y1) & (rows < y2) & (cols >= x1) & (cols < x2)
    rolled = jnp.roll(batch, 1, axis=0)
    mixed = jnp.where(inside[None, None], rolled, batch)
    onehot = jax.nn.one_hot(target, num_classes, dtype=batch.dtype)
    mixed_t = lam * onehot + (1.0 - lam) * jnp.roll(onehot, 1, axis=0)
    return mixed, mixed_t


if __name__ == "__main__":
    num_classes = 10
    B, C, H, W = 2, 4, 16, 16

    root = jax.random.PRNGKey(0)
    k_data, k_tgt, k_aug = jax.random.split(root, 3)

    batch = jax.random.normal(k_data, (B, C, H, W), dtype=jnp.float32)
    target = jax.random.randint(k_tgt, (B,), 0, num_classes, dtype=jnp.int32)

    fn = jax.jit(random_cutmix, static_argnums=(3,))
    mixed_batch, mixed_target = fn(batch, target, k_aug, num_classes)
    jax.block_until_ready((mixed_batch, mixed_target))

    ref_batch, ref_target = random_cutmix_reference(batch, target, k_aug, num_classes)

    assert mixed_batch.shape == (B, C, H, W) and mixed_batch.dtype == jnp.float32
    assert mixed_target.shape == (B, num_classes)
    # Pallas result matches the pure-jnp reference (same key -> same box/lambda).
    assert bool(jnp.allclose(mixed_batch, ref_batch))
    assert bool(jnp.allclose(mixed_target, ref_target, atol=1e-6))
    # Each mixed target row is a convex combination of two one-hots -> sums to 1.
    assert bool(jnp.allclose(mixed_target.sum(axis=-1), 1.0, atol=1e-5))

    print("KERNEL_OK")
</pallas_src>

<mosaic_0001>
module attributes {stable_mosaic.version = 11 : i64} {
  func.func @kernel(%arg0: i32, %arg1: memref<4xi32, #tpu.memory_space<smem>>, %arg2: memref<2x4x256xf32, #tpu.memory_space<vmem>>, %arg3: memref<2x4x256xf32, #tpu.memory_space<any>>, %arg4: memref<2x4x256xf32, #tpu.memory_space<vmem>>, %arg5: memref<4x256xf32, #tpu.memory_space<vmem>>, %arg6: memref<!tpu.dma_semaphore, #tpu.memory_space<semaphore_mem>>) attributes {dimension_semantics = [#tpu.dimension_semantics<arbitrary>], iteration_bounds = array<i64: 1>, scalar_prefetch = 0 : i64, scratch_operands = 2 : i64, tpu.core_type = #tpu.core_type<tc>, window_params = [{transform_indices = @transform_0, window_bounds = array<i64: 4>}, {transform_indices = @transform_1, window_bounds = array<i64: 2, 4, 256>}, {}, {transform_indices = @transform_3, window_bounds = array<i64: 2, 4, 256>}]} {
    %c0_i32 = arith.constant 0 : i32
    %0 = arith.cmpi eq, %arg0, %c0_i32 : i32
    %1 = arith.extui %0 : i1 to i32
    %c0_i32_0 = arith.constant 0 : i32
    %2 = arith.cmpi ne, %1, %c0_i32_0 : i32
    scf.if %2 {
      %c1_i32_31 = arith.constant 1 : i32
      %c0_i32_32 = arith.constant 0 : i32
      %c0_i32_33 = arith.constant 0 : i32
      %61 = tpu.memref_slice %arg3[%c1_i32_31, %c0_i32_32, %c0_i32_33] : memref<2x4x256xf32, #tpu.memory_space<any>> -> memref<1x4x256xf32, #tpu.memory_space<any>>
      %62 = tpu.memref_squeeze %61 : memref<1x4x256xf32, #tpu.memory_space<any>> -> memref<4x256xf32, #tpu.memory_space<any>>
      tpu.enqueue_dma source(%62 : memref<4x256xf32, #tpu.memory_space<any>>) target(%arg5 : memref<4x256xf32, #tpu.memory_space<vmem>>) target_semaphore(%arg6 : memref<!tpu.dma_semaphore, #tpu.memory_space<semaphore_mem>>)
      %c1_i32_34 = arith.constant 1 : i32
      %c0_i32_35 = arith.constant 0 : i32
      %c0_i32_36 = arith.constant 0 : i32
      %63 = tpu.memref_slice %arg3[%c1_i32_34, %c0_i32_35, %c0_i32_36] : memref<2x4x256xf32, #tpu.memory_space<any>> -> memref<1x4x256xf32, #tpu.memory_space<any>>
      %64 = tpu.memref_squeeze %63 : memref<1x4x256xf32, #tpu.memory_space<any>> -> memref<4x256xf32, #tpu.memory_space<any>>
      tpu.wait_dma2 semaphore(%arg6 : memref<!tpu.dma_semaphore, #tpu.memory_space<semaphore_mem>>) src(%64 : memref<4x256xf32, #tpu.memory_space<any>>) dst(%arg5 : memref<4x256xf32, #tpu.memory_space<vmem>>)
    } else {
    }
    %c0 = arith.constant 0 : index
    %3 = memref.load %arg1[%c0] : memref<4xi32, #tpu.memory_space<smem>>
    %c1 = arith.constant 1 : index
    %4 = memref.load %arg1[%c1] : memref<4xi32, #tpu.memory_space<smem>>
    %c2 = arith.constant 2 : index
    %5 = memref.load %arg1[%c2] : memref<4xi32, #tpu.memory_space<smem>>
    %c3 = arith.constant 3 : index
    %6 = memref.load %arg1[%c3] : memref<4xi32, #tpu.memory_space<smem>>
    %7 = tpu.iota {dimensions = array<i32: 2>} : vector<1x1x256xi32>
    %c16_i32 = arith.constant 16 : i32
    %c0_i32_1 = arith.constant 0 : i32
    %8 = arith.cmpi eq, %c16_i32, %c0_i32_1 : i32
    %c1_i32 = arith.constant 1 : i32
    %9 = arith.select %8, %c1_i32, %c16_i32 : i32
    %10 = vector.broadcast %9 : i32 to vector<1x1x256xi32>
    %11 = arith.remsi %7, %10 : vector<1x1x256xi32>
    %c0_i32_2 = arith.constant 0 : i32
    %12 = vector.broadcast %c0_i32_2 : i32 to vector<1x1x256xi32>
    %13 = arith.cmpi ne, %11, %12 : vector<1x1x256xi32>
    %c0_i32_3 = arith.constant 0 : i32
    %14 = vector.broadcast %c0_i32_3 : i32 to vector<1x1x256xi32>
    %15 = arith.cmpi slt, %11, %14 : vector<1x1x256xi32>
    %c0_i32_4 = arith.constant 0 : i32
    %16 = arith.cmpi slt, %9, %c0_i32_4 : i32
    %17 = vector.broadcast %16 : i1 to vector<1x1x256xi1>
    %18 = vector.broadcast %17 : vector<1x1x256xi1> to vector<1x1x256xi1>
    %19 = arith.xori %15, %18 : vector<1x1x256xi1>
    %20 = arith.andi %19, %13 : vector<1x1x256xi1>
    %21 = vector.broadcast %9 : i32 to vector<1x1x256xi32>
    %22 = arith.addi %11, %21 : vector<1x1x256xi32>
    %23 = arith.select %20, %22, %11 : vector<1x1x256xi1>, vector<1x1x256xi32>
    %c16_i32_5 = arith.constant 16 : i32
    %24 = arith.muli %3, %c16_i32_5 : i32
    %25 = vector.broadcast %24 : i32 to vector<1x1x256xi32>
    %26 = arith.cmpi sge, %7, %25 : vector<1x1x256xi32>
    %c16_i32_6 = arith.constant 16 : i32
    %27 = arith.muli %4, %c16_i32_6 : i32
    %28 = vector.broadcast %27 : i32 to vector<1x1x256xi32>
    %29 = arith.cmpi slt, %7, %28 : vector<1x1x256xi32>
    %30 = arith.andi %26, %29 : vector<1x1x256xi1>
    %31 = vector.broadcast %5 : i32 to vector<1x1x256xi32>
    %32 = arith.cmpi sge, %23, %31 : vector<1x1x256xi32>
    %33 = arith.andi %30, %32 : vector<1x1x256xi1>
    %34 = vector.broadcast %6 : i32 to vector<1x1x256xi32>
    %35 = arith.cmpi slt, %23, %34 : vector<1x1x256xi32>
    %36 = arith.andi %33, %35 : vector<1x1x256xi1>
    %37 = arith.extui %36 : vector<1x1x256xi1> to vector<1x1x256xi32>
    %38 = vector.shape_cast %37 : vector<1x1x256xi32> to vector<1x256xi32>
    %39 = vector.shape_cast %38 : vector<1x256xi32> to vector<1x256xi32>
    %40 = vector.broadcast %39 : vector<1x256xi32> to vector<4x256xi32>
    %c0_i32_7 = arith.constant 0 : i32
    %41 = vector.broadcast %c0_i32_7 : i32 to vector<4x256xi32>
    %42 = arith.cmpi ne, %40, %41 : vector<4x256xi32>
    %c0_8 = arith.constant 0 : index
    %c0_9 = arith.constant 0 : index
    %43 = vector.load %arg5[%c0_8, %c0_9] : memref<4x256xf32, #tpu.memory_space<vmem>>, vector<4x256xf32>
    %c0_10 = arith.constant 0 : index
    %c0_11 = arith.constant 0 : index
    %c0_12 = arith.constant 0 : index
    %44 = vector.load %arg2[%c0_10, %c0_11, %c0_12] : memref<2x4x256xf32, #tpu.memory_space<vmem>>, vector<1x4x256xf32>
    %45 = vector.shape_cast %44 : vector<1x4x256xf32> to vector<4x256xf32>
    %46 = arith.select %42, %43, %45 : vector<4x256xi1>, vector<4x256xf32>
    %c0_13 = arith.constant 0 : index
    %c0_14 = arith.constant 0 : index
    %c0_15 = arith.constant 0 : index
    %47 = vector.load %arg4[%c0_13, %c0_14, %c0_15] : memref<2x4x256xf32, #tpu.memory_space<vmem>>, vector<1x4x256xf32>
    %48 = vector.shape_cast %47 : vector<1x4x256xf32> to vector<4x256xf32>
    %49 = vector.shape_cast %46 : vector<4x256xf32> to vector<1x4x256xf32>
    tpu.vector_store %arg4[%c0_13, %c0_14, %c0_15], %49 {strides = array<i32>} : memref<2x4x256xf32, #tpu.memory_space<vmem>>, vector<1x4x256xf32>,
    %50 = vector.shape_cast %37 : vector<1x1x256xi32> to vector<1x1x256xi32>
    %51 = vector.broadcast %50 : vector<1x1x256xi32> to vector<1x4x256xi32>
    %c0_i32_16 = arith.constant 0 : i32
    %52 = vector.broadcast %c0_i32_16 : i32 to vector<1x4x256xi32>
    %53 = arith.cmpi ne, %51, %52 : vector<1x4x256xi32>
    %c0_17 = arith.constant 0 : index
    %c0_18 = arith.constant 0 : index
    %c0_19 = arith.constant 0 : index
    %54 = vector.load %arg2[%c0_17, %c0_18, %c0_19] : memref<2x4x256xf32, #tpu.memory_space<vmem>>, vector<1x4x256xf32>
    %c1_20 = arith.constant 1 : index
    %c0_21 = arith.constant 0 : index
    %c0_22 = arith.constant 0 : index
    %55 = vector.load %arg2[%c1_20, %c0_21, %c0_22] : memref<2x4x256xf32, #tpu.memory_space<vmem>>, vector<1x4x256xf32>
    %56 = arith.select %53, %54, %55 : vector<1x4x256xi1>, vector<1x4x256xf32>
    %c1_23 = arith.constant 1 : index
    %c0_24 = arith.constant 0 : index
    %c0_25 = arith.constant 0 : index
    %57 = vector.load %arg4[%c1_23, %c0_24, %c0_25] : memref<2x4x256xf32, #tpu.memory_space<vmem>>, vector<1x4x256xf32>
    tpu.vector_store %arg4[%c1_23, %c0_24, %c0_25], %56 {strides = array<i32>} : memref<2x4x256xf32, #tpu.memory_space<vmem>>, vector<1x4x256xf32>,
    %c1_26 = arith.constant 1 : index
    %c0_27 = arith.constant 0 : index
    %c0_28 = arith.constant 0 : index
    %58 = vector.load %arg2[%c1_26, %c0_27, %c0_28] : memref<2x4x256xf32, #tpu.memory_space<vmem>>, vector<1x4x256xf32>
    %59 = vector.shape_cast %58 : vector<1x4x256xf32> to vector<4x256xf32>
    %c0_29 = arith.constant 0 : index
    %c0_30 = arith.constant 0 : index
    %60 = vector.load %arg5[%c0_29, %c0_30] : memref<4x256xf32, #tpu.memory_space<vmem>>, vector<4x256xf32>
    tpu.vector_store %arg5[%c0_29, %c0_30], %59 {strides = array<i32>} : memref<4x256xf32, #tpu.memory_space<vmem>>, vector<4x256xf32>,
    return
  }
  func.func @transform_0(%arg0: i32) -> i32 {
    %c0_i32 = arith.constant 0 : i32
    %c0_i32_0 = arith.constant 0 : i32
    return %c0_i32 : i32
  }
  func.func @transform_1(%arg0: i32) -> (i32, i32, i32) {
    %c0_i32 = arith.constant 0 : i32
    %c0_i32_0 = arith.constant 0 : i32
    %c0_i32_1 = arith.constant 0 : i32
    return %arg0, %c0_i32, %c0_i32_0 : i32, i32, i32
  }
  func.func @transform_3(%arg0: i32) -> (i32, i32, i32) {
    %c0_i32 = arith.constant 0 : i32
    %c0_i32_0 = arith.constant 0 : i32
    %c0_i32_1 = arith.constant 0 : i32
    return %arg0, %c0_i32, %c0_i32_0 : i32, i32, i32
  }
}

</mosaic_0001>

<llo_original>
// kernel: random_cutmix.1
$region0: #{random_cutmix.1}
  #allocation0 [shape = 'u32[]', space=smem, size = 0x4, offset = 0x4, fixed_abs, tag = 'smem constant byte address 0x4 - core index']
  #allocation1 [shape = 'u32[144,128]{1,0:T(1,128)}', space=vmem, size = 0x12000, scoped, tag = 'internal scratch']
  #allocation2 [shape = 'f32[4,256]{1,0:T(4,128)}', space=vmem, size = 0x1000, scoped, tag = 'scratch operand']
  #allocation3 [shape = 's32[1]{0}', space=sflag, size = 0x4, scoped, tag = 'scratch operand']
  #allocation6 [shape = 's32[]', space=sflag, size = 0x4, offset = 0, fixed_abs, tag = 'sflag constant byte address 0x0 - dummy sync flag']
  %s0 = inlined_call_operand.vmem [shape: s32[4], index: 0, kind: input, shape index: {}]
  %s1 = inlined_call_operand.vmem [shape: f32[2,4,256], index: 1, kind: input, shape index: {}, may-alias: {1,2}]
  %s2 = inlined_call_operand.vmem [shape: f32[2,4,256], index: 2, kind: input, shape index: {}, may-alias: {1,2}]
  %s3 = inlined_call_operand.vmem [shape: f32[2,4,256], index: 3, kind: output, shape index: {}]
  %s4 = sld [smem:[#allocation0]]
  $region60: #{random_cutmix.1} parent=0
    _
  %s6 = ssub.s32 1, %s4
  %s7 = scalar_select 0, %s6, %s4
  $region1: #{random_cutmix.1} parent=0
    #allocation4 [shape = 'u8[512]{0}', space=smem, size = 0x200, scoped, tag = 'input window, operand 0, single buffered']
    #allocation5 [shape = 's32[1]{0}', space=sflag, size = 0x4, scoped, tag = 'scoped memory for random_cutmix.1']
    %8 = vsyncpa [#allocation5], 0
    // Predicated region
    $region2: #{random_cutmix.1} parent=1 // pred_check
      _
    $region3: #{random_cutmix.1} parent=1 // pred_check_branch
      %10 = sbr.rel (0) target = $region5
    $region4: #{random_cutmix.1} parent=1 // pred_region
      %s12 = ssub.s32 16, 16
      %13 = vsyncadd [#allocation5], %s12
      %s15 = sshll.u32 %s0, 4
      %s16 = int_to_ptr.vmem [resolvable:$true] %s15
      %18 = dma.vmem_to_smem %s16, 16, [#allocation4], [#allocation5]
    $region5: #{random_cutmix.1} parent=1 // pred_fallthru
      _
    // Predicated region
    $region6: #{random_cutmix.1} parent=1 // pred_check
      _
    $region7: #{random_cutmix.1} parent=1 // pred_check_branch
      %20 = sbr.rel (0) target = $region9
    $region8: #{random_cutmix.1} parent=1 // pred_region
      _
    $region9: #{random_cutmix.1} parent=1 // pred_fallthru
      _
    // Predicated region
    $region10: #{random_cutmix.1} parent=1 // pred_check
      _
    $region11: #{random_cutmix.1} parent=1 // pred_check_branch
      %22 = sbr.rel (0) target = $region13
    $region12: #{random_cutmix.1} parent=1 // pred_region
      %23 = dma.done [#allocation5], 16
    $region13: #{random_cutmix.1} parent=1 // pred_fallthru
      _
    %24 = sfence
    %p25 = scmp.eq.s32.totalorder 0, 0
    // Predicated region
    $region14: #{random_cutmix.1} parent=1 // pred_check
      %p26 = pneg %p25
    $region15: #{random_cutmix.1} parent=1 // pred_check_branch
      %28 = sbr.rel (%p26) target = $region17
    $region16: #{random_cutmix.1} parent=1 // pred_region
      %s29 = scalar_lea.vmem %s2, 8
      %p31 = scmp.lt.u32.totalorder 8, 8
      %p32 = pneg %p31
      // Predicated region
      $region18: #{random_cutmix.1} parent=16 // pred_check
        _
      $region19: #{random_cutmix.1} parent=16 // pred_check_branch
        %34 = sbr.rel (%p31) target = $region21
      $region20: #{random_cutmix.1} parent=16 // pred_region
        %s50 = sand.u32 8, 7
        %p51 = scmp.eq.s32.totalorder %s50, 0
        // Predicated region
        $region33: #{random_cutmix.1} parent=20 // pred_check
          %p52 = pneg %p51
        $region34: #{random_cutmix.1} parent=20 // pred_check_branch
          %54 = sbr.rel (%p52) target = $region36
        $region35: #{random_cutmix.1} parent=20 // pred_region
          loop: start=0, step=1, limit=1
          $region37: #{random_cutmix.1} parent=35 // loop_pre_header
            _
          $region38: #{random_cutmix.1} parent=35 // loop_header
            %s56 = sphi 0, %s60
            %p57 = scmp.ge.s32.totalorder %s56, 1
            %s61 = sphi %s29, %s29
            %s62 = sphi [#allocation2], [#allocation2]
          $region39: #{random_cutmix.1} parent=35 // loop_header_branch
            %59 = sbr.rel (%p57) target = $region43
          $region40: #{random_cutmix.1} parent=35 // loop_body
            %v63 = vld [vmem:[%s61] sm:$0xff]
            %64 = vst [vmem:[%s62] sm:$0xff] %v63
          $region41: #{random_cutmix.1} parent=35 // loop_footer
            %s60 = sadd.s32 1, %s56
          $region42: #{random_cutmix.1} parent=35 // loop_footer_branch
            %55 = sbr.rel target = $region38
          $region43: #{random_cutmix.1} parent=35 // loop_exit
            _
        $region36: #{random_cutmix.1} parent=20 // pred_fallthru
          _
        %p65 = pneg %p51
        // Predicated region
        $region44: #{random_cutmix.1} parent=20 // pred_check
          _
        $region45: #{random_cutmix.1} parent=20 // pred_check_branch
          %67 = sbr.rel (%p51) target = $region47
        $region46: #{random_cutmix.1} parent=20 // pred_region
          %s68 = sand.u32 8, 7
        $region47: #{random_cutmix.1} parent=20 // pred_fallthru
          _
      $region21: #{random_cutmix.1} parent=16 // pred_fallthru
        _
      // Predicated region
      $region22: #{random_cutmix.1} parent=16 // pred_check
        %p35 = pneg %p31
      $region23: #{random_cutmix.1} parent=16 // pred_check_branch
        %37 = sbr.rel (%p35) target = $region25
      $region24: #{random_cutmix.1} parent=16 // pred_region
        %s38 = sshll.u32 1, 8
        %s39 = ssub.s32 %s38, 1
        loop: start=0, step=1, limit=1
        $region26: #{random_cutmix.1} parent=24 // loop_pre_header
          _
        $region27: #{random_cutmix.1} parent=24 // loop_header
          %s41 = sphi 0, %s45
          %p42 = scmp.ge.s32.totalorder %s41, 1
          %s46 = sphi %s29, %s29
          %s47 = sphi [#allocation2], [#allocation2]
        $region28: #{random_cutmix.1} parent=24 // loop_header_branch
          %44 = sbr.rel (%p42) target = $region32
        $region29: #{random_cutmix.1} parent=24 // loop_body
          %v48 = vld [vmem:[%s46] sm:%s39]
          %49 = vst [vmem:[%s47] sm:%s39] %v48
        $region30: #{random_cutmix.1} parent=24 // loop_footer
          %s45 = sadd.s32 1, %s41
        $region31: #{random_cutmix.1} parent=24 // loop_footer_branch
          %40 = sbr.rel target = $region27
        $region32: #{random_cutmix.1} parent=24 // loop_exit
          _
      $region25: #{random_cutmix.1} parent=16 // pred_fallthru
        _
      // Predicated region
      $region48: #{random_cutmix.1} parent=16 // pred_check
        _
      $region49: #{random_cutmix.1} parent=16 // pred_check_branch
        %71 = sbr.rel (0) target = $region51
      $region50: #{random_cutmix.1} parent=16 // pred_region
        %72 = vsyncadd [#allocation3], 128
      $region51: #{random_cutmix.1} parent=16 // pred_fallthru
        _
      %s73 = smul.u32 4, 1
      %s74 = smul.u32 %s73, 2
      %s75 = sshll.u32 %s74, 4
      %76 = dma.done [#allocation3], %s75
    $region17: #{random_cutmix.1} parent=1 // pred_fallthru
      _
    %s77 = sld [smem:[#allocation4]]
    %s78 = sld [smem:[#allocation4 + $0x1]]
    %s79 = sld [smem:[#allocation4 + $0x2]]
    %s80 = sld [smem:[#allocation4 + $0x3]]
    %v81 = vlaneseq
    %v82 = vand.u32 %v81, 127
    %v83 = vadd.s32 %v82, 128
    %vm84 = vcmp.lt.s32.totalorder %v82, 0
    %v85 = vsub.s32 0, %v82
    %v86 = vsel %vm84, %v85, %v82
    %v87 = vshrl.u32 %v86, 4
    %v88 = vand.u32 %v86, 15
    %v89 = vsub.s32 0, %v88
    %v90 = vsel %vm84, %v89, %v88
    %vm91 = vcmp.lt.s32.totalorder %v83, 0
    %v92 = vsub.s32 0, %v83
    %v93 = vsel %vm91, %v92, %v83
    %v94 = vshrl.u32 %v93, 4
    %v95 = vand.u32 %v93, 15
    %v96 = vsub.s32 0, %v95
    %v97 = vsel %vm91, %v96, %v95
    %vm98 = vcmp.ne.s32.totalorder %v90, 0
    %vm99 = vcmp.ne.s32.totalorder %v97, 0
    %vm100 = vcmp.lt.s32.totalorder %v90, 0
    %vm101 = vcmp.lt.s32.totalorder %v97, 0
    %vm102 = vmand %vm100, %vm98
    %vm103 = vmand %vm101, %vm99
    %v104 = vadd.s32 %v90, 16
    %v105 = vadd.s32 %v97, 16
    %v106 = vsel %vm102, %v104, %v90
    %v107 = vsel %vm103, %v105, %v97
    %s108 = smul.u32 %s77, 16
    %v109 = vstv %s108
    %vm110 = vcmp.ge.s32.totalorder %v82, %v109
    %vm111 = vcmp.ge.s32.totalorder %v83, %v109
    %s112 = smul.u32 %s78, 16
    %v113 = vstv %s112
    %vm114 = vcmp.lt.s32.totalorder %v82, %v113
    %vm115 = vcmp.lt.s32.totalorder %v83, %v113
    %vm116 = vmand %vm110, %vm114
    %vm117 = vmand %vm111, %vm115
    %v118 = vstv %s79
    %vm119 = vcmp.ge.s32.totalorder %v106, %v118
    %vm120 = vcmp.ge.s32.totalorder %v107, %v118
    %vm121 = vmand %vm116, %vm119
    %vm122 = vmand %vm117, %vm120
    %v123 = vstv %s80
    %vm124 = vcmp.lt.s32.totalorder %v106, %v123
    %vm125 = vcmp.lt.s32.totalorder %v107, %v123
    %vm126 = vmand %vm121, %vm124
    %vm127 = vmand %vm122, %vm125
    %v128 = vld [vmem:[#allocation2] sm:$0xff]
    %v129 = vld [vmem:[%s1] sm:$0xff]
    %v131 = vcombine.high %v128, %v128
    %v134 = vcombine.high %v129, %v129
    %v136 = vsel %vm126, %v128, %v129
    %v137 = vsel %vm127, %v131, %v134
    %v140 = vcombine.low %v136, %v137
    %142 = vst [vmem:[%s3] sm:$0xff] %v140
    %v143 = vld [vmem:[%s1] sm:$0xff]
    %s144 = scalar_lea.vmem %s1, 8
    %v145 = vld [vmem:[%s144] sm:$0xff]
    %v147 = vcombine.high %v143, %v143
    %v150 = vcombine.high %v145, %v145
    %v152 = vsel %vm126, %v143, %v145
    %v153 = vsel %vm127, %v147, %v150
    %v156 = vcombine.low %v152, %v153
    %s158 = scalar_lea.vmem %s3, 8
    %159 = vst [vmem:[%s158] sm:$0xff] %v156
    %v160 = vld [vmem:[%s144] sm:$0xff]
    %161 = vst [vmem:[#allocation2] sm:$0xff] %v160
    // Predicated region
    $region52: #{random_cutmix.1} parent=1 // pred_check
      _
    $region53: #{random_cutmix.1} parent=1 // pred_check_branch
      %163 = sbr.rel (0) target = $region55
    $region54: #{random_cutmix.1} parent=1 // pred_region
      _
    $region55: #{random_cutmix.1} parent=1 // pred_fallthru
      _
    // Predicated region
    $region56: #{random_cutmix.1} parent=1 // pred_check
      _
    $region57: #{random_cutmix.1} parent=1 // pred_check_branch
      %165 = sbr.rel (0) target = $region59
    $region58: #{random_cutmix.1} parent=1 // pred_region
      _
    $region59: #{random_cutmix.1} parent=1 // pred_fallthru
      _
    %166 = vsyncpa [#allocation5], 1
  %167 = vsyncmov [#allocation3]
  %s168 = vpop.sfrf %167
  %p169 = scmp.eq.s32.totalorder %s168, 0
  %p170 = pneg %p169
  %172 = shalt.err (%p170)

</llo_original>
